<compile_context>
chip_gen: v5e
topology: v5e:2x2
jax: 0.10.0
libtpu: 0.0.40
codegen_flags: <defaults>
</compile_context>

<pallas_src>
import functools

import jax
import jax.numpy as jnp
from jax.experimental import pallas as pl
from jax.experimental.pallas import tpu as pltpu

_LANES = 128  # lane-dense width for the packed input


def _awl_kernel(packed_ref, out_ref, *, num):
    # packed_ref: (2, padded) f32 in VMEM; row 0 = losses, row 1 = params.
    # out_ref:    (1, 1) f32 in SMEM (scalar output).
    x = packed_ref[...]                     # single unmasked full-tile load
    l = x[0:1, :]                           # (1, padded)
    p = x[1:2, :]                           # (1, padded)
    p2 = p * p
    inv_p2 = pl.reciprocal(p2, approx=False)            # EUP reciprocal, exact
    # NOTE: p ~ 1 here, so log(1 + p2) has no small-argument precision issue;
    # kept as log(1 + p2) to stay on the guaranteed-lowering path.
    terms = l * (0.5 * inv_p2) + jnp.log(1.0 + p2)       # (1, padded)
    lane = jax.lax.broadcasted_iota(jnp.int32, terms.shape, dimension=1)
    terms = jnp.where(lane < num, terms, 0.0)            # drop padded lanes
    out_ref[0, 0] = jnp.sum(terms)                       # scalar -> SMEM


@jax.jit
def automatic_weighted_loss(losses, params):
    """losses: (num,) f32, params: (num,) f32 -> scalar f32."""
    num = losses.shape[0]
    padded = max(_LANES, ((num + _LANES - 1) // _LANES) * _LANES)

    # Pack both inputs into one lane-dense (2, padded) array.
    # Padded param lanes are 1.0 (never 0.0 -> no inf/NaN); padded loss lanes are 0.0.
    packed = jnp.ones((2, padded), dtype=jnp.float32)
    packed = packed.at[0, :].set(0.0)
    packed = packed.at[0, :num].set(losses.astype(jnp.float32))
    packed = packed.at[1, :num].set(params.astype(jnp.float32))

    out = pl.pallas_call(
        functools.partial(_awl_kernel, num=num),
        out_shape=jax.ShapeDtypeStruct((1, 1), jnp.float32),
        in_specs=[pl.BlockSpec((2, padded), lambda: (0, 0))],
        out_specs=pl.BlockSpec(memory_space=pltpu.MemorySpace.SMEM),
    )(packed)
    return out.reshape(())  # fused under jit; no host-side slice


class AutomaticWeightedLossPallas:
    """Mirror of the PyTorch module; params initialized deterministically to ones."""

    def __init__(self, num=2):
        self.num = num
        self.params = jnp.ones((num,), dtype=jnp.float32)

    def __call__(self, *x):
        # Prefer a single already-stacked (num,) device array (cheapest path);
        # also accept num separate scalars like the PyTorch module.
        if len(x) == 1 and getattr(x[0], "ndim", 0) == 1:
            losses = jnp.asarray(x[0], dtype=jnp.float32)
        else:
            losses = jnp.stack([jnp.asarray(v, dtype=jnp.float32) for v in x])
        assert losses.shape[0] == self.num
        return automatic_weighted_loss(losses, self.params)


if __name__ == "__main__":
    num = 4
    key = jax.random.PRNGKey(0)
    # Synthetic per-task scalar losses (positive, small shapes).
    raw = jax.random.uniform(key, (num,), dtype=jnp.float32, minval=0.1, maxval=3.0)

    awl = AutomaticWeightedLossPallas(num=num)
    out = awl(raw)  # pass the stacked (num,) array directly — no per-scalar glue
    out = jax.block_until_ready(out)

    # Pure-JAX reference for correctness check.
    p = awl.params
    ref = jnp.sum(0.5 / (p ** 2) * raw + jnp.log(1.0 + p ** 2))
    assert jnp.allclose(out, ref, rtol=1e-5, atol=1e-5), (out, ref)

    print("KERNEL_OK")
</pallas_src>

<mosaic_0001>
module attributes {stable_mosaic.version = 11 : i64} {
  func.func @_awl_kernel(%arg0: memref<2x128xf32, #tpu.memory_space<vmem>>, %arg1: memref<1x1xf32, #tpu.memory_space<smem>>) attributes {dimension_semantics = [], scalar_prefetch = 0 : i64, scratch_operands = 0 : i64, tpu.core_type = #tpu.core_type<tc>} {
    %c0 = arith.constant 0 : index
    %c0_0 = arith.constant 0 : index
    %0 = vector.load %arg0[%c0, %c0_0] : memref<2x128xf32, #tpu.memory_space<vmem>>, vector<2x128xf32>
    %1 = vector.extract_strided_slice %0 {offsets = [0, 0], sizes = [1, 128], strides = [1, 1]} : vector<2x128xf32> to vector<1x128xf32>
    %2 = vector.extract_strided_slice %0 {offsets = [1, 0], sizes = [1, 128], strides = [1, 1]} : vector<2x128xf32> to vector<1x128xf32>
    %3 = arith.mulf %2, %2 : vector<1x128xf32>
    %4 = tpu.reciprocal %3 : vector<1x128xf32> -> vector<1x128xf32>
    %cst = arith.constant 5.000000e-01 : f32
    %5 = vector.broadcast %cst : f32 to vector<1x128xf32>
    %6 = arith.mulf %5, %4 : vector<1x128xf32>
    %7 = arith.mulf %1, %6 : vector<1x128xf32>
    %cst_1 = arith.constant 1.000000e+00 : f32
    %8 = vector.broadcast %cst_1 : f32 to vector<1x128xf32>
    %9 = arith.addf %8, %3 : vector<1x128xf32>
    %10 = math.log %9 : vector<1x128xf32>
    %11 = arith.addf %7, %10 : vector<1x128xf32>
    %12 = tpu.iota {dimensions = array<i32: 1>} : vector<1x128xi32>
    %c4_i32 = arith.constant 4 : i32
    %13 = vector.broadcast %c4_i32 : i32 to vector<1x128xi32>
    %14 = arith.cmpi slt, %12, %13 : vector<1x128xi32>
    %cst_2 = arith.constant 0.000000e+00 : f32
    %15 = vector.broadcast %cst_2 : f32 to vector<1x128xf32>
    %16 = arith.select %14, %11, %15 : vector<1x128xi1>, vector<1x128xf32>
    %17 = vector.shape_cast %16 : vector<1x128xf32> to vector<1x1x128xf32>
    %cst_3 = arith.constant dense<0.000000e+00> : vector<1xf32>
    %18 = vector.multi_reduction <add>, %17, %cst_3 [1, 2] : vector<1x1x128xf32> to vector<1xf32>
    %19 = vector.shape_cast %18 : vector<1xf32> to vector<1x1x1xf32>
    %20 = vector.extract %19[0, 0, 0] : f32 from vector<1x1x1xf32>
    %c0_4 = arith.constant 0 : index
    %c0_5 = arith.constant 0 : index
    %21 = memref.load %arg1[%c0_4, %c0_5] : memref<1x1xf32, #tpu.memory_space<smem>>
    memref.store %20, %arg1[%c0_4, %c0_5] : memref<1x1xf32, #tpu.memory_space<smem>>
    return
  }
}

</mosaic_0001>

<llo_original>
// kernel: automatic_weighted_loss.1
$region0: #{automatic_weighted_loss.1}
  #allocation0 [shape = 'u32[]', space=smem, size = 0x4, offset = 0x4, fixed_abs, tag = 'smem constant byte address 0x4 - core index']
  #allocation1 [shape = 'u32[72,128]{1,0:T(1,128)}', space=vmem, size = 0x9000, scoped, tag = 'internal scratch']
  %s0 = inlined_call_operand.vmem [shape: f32[2,128], index: 0, kind: input, shape index: {}]
  %s1 = inlined_call_operand.hbm [shape: f32[1,1], index: 1, kind: output, shape index: {}]
  %s2 = sld [smem:[#allocation0]]
  $region14: #{automatic_weighted_loss.1} parent=0
    _
  %s4 = ssub.s32 1, %s2
  %s5 = scalar_select 0, %s4, %s2
  $region1: #{automatic_weighted_loss.1} parent=0
    #allocation2 [shape = 'u8[512]{0}', space=smem, size = 0x200, scoped, tag = 'output window, operand 0, single buffered']
    #allocation3 [shape = 's32[1]{0}', space=sflag, size = 0x4, scoped, tag = 'scoped memory for automatic_weighted_loss.1']
    %6 = vsyncpa [#allocation3], 0
    // Predicated region
    $region2: #{automatic_weighted_loss.1} parent=1 // pred_check
      _
    $region3: #{automatic_weighted_loss.1} parent=1 // pred_check_branch
      %8 = sbr.rel (0) target = $region5
    $region4: #{automatic_weighted_loss.1} parent=1 // pred_region
      _
    $region5: #{automatic_weighted_loss.1} parent=1 // pred_fallthru
      _
    %v9 = vld [vmem:[%s0] sm:$0x3]
    %v10 = vmul.f32 %v9, %v9
    %v11 = vrcp.pop %v10
    %v12 = vmul.f32 %v10, %v11
    %v13 = vsub.f32 1.0, %v12
    %v14 = vmul.f32 %v11, %v13
    %v15 = vadd.f32 %v11, %v14
    %vm16 = vweird.f32 %v10
    %vm17 = vweird.f32 %v11
    %vm18 = vmor %vm16, %vm17
    %v19 = vsel %vm18, %v11, %v15
    %v20 = vand.u32 2147483647, %v10
    %vm21 = vcmp.eq.f32.partialorder %v20, 8.507059e+37
    %v22 = vand.u32 %v10, 2147483648
    %v23 = vor.u32 1.1754944e-38, %v22
    %v24 = vsel %vm21, %v23, %v19
    %v25 = vmul.f32 %v24, 0.5
    %v27 = vrot.slane %v25, 1
    %v29 = vmul.f32 %v9, %v27
    %v30 = vadd.f32 %v10, 1.0
    %v31 = vlog2.pop %v30
    %v32 = vmul.f32 %v31, 0.6931472
    %v34 = vrot.slane %v32, 1
    %v36 = vadd.f32 %v29, %v34
    %v37 = vlaneseq
    %v38 = vand.u32 %v37, 127
    %vm39 = vcmp.lt.s32.totalorder %v38, 4
    %v40 = vsel %vm39, %v36, 0.0
    %vm41 = vcmask 1040384
    %v42 = vsel %vm41, %v40, 0.0
    %43 = vadd.xlane.f32.xlu0 %v42
    %v44 = vpop.xlane.xlu0 %43
    %v45 = vrot.slane %v44, 4
    %v46 = vadd.f32 %v44, %v45
    %v47 = vrot.slane %v46, 2
    %v48 = vadd.f32 %v46, %v47
    %v49 = vrot.slane %v48, 1
    %v50 = vadd.f32 %v48, %v49
    %s51 = vtos %v50
    %s52 = scalar_lea.smem [#allocation2], 0
    %53 = sst [smem:[%s52]] %s51
    // Predicated region
    $region6: #{automatic_weighted_loss.1} parent=1 // pred_check
      _
    $region7: #{automatic_weighted_loss.1} parent=1 // pred_check_branch
      %55 = sbr.rel (0) target = $region9
    $region8: #{automatic_weighted_loss.1} parent=1 // pred_region
      %57 = vsyncadd [#allocation3], 0
      %s59 = sshll.u32 %s1, 4
      %s60 = int_to_ptr.hbm [resolvable:$true] %s59
      %62 = dma.smem_to_hbm [#allocation2], 16, %s60, [#allocation3]
    $region9: #{automatic_weighted_loss.1} parent=1 // pred_fallthru
      _
    // Predicated region
    $region10: #{automatic_weighted_loss.1} parent=1 // pred_check
      _
    $region11: #{automatic_weighted_loss.1} parent=1 // pred_check_branch
      %64 = sbr.rel (0) target = $region13
    $region12: #{automatic_weighted_loss.1} parent=1 // pred_region
      %66 = dma.done [#allocation3], 16
    $region13: #{automatic_weighted_loss.1} parent=1 // pred_fallthru
      _
    %67 = sfence
    %68 = vsyncpa [#allocation3], 1

</llo_original>
